<compile_context>
chip_gen: v5e
topology: v5e:2x2
jax: 0.10.0
libtpu: 0.0.40
codegen_flags: <defaults>
</compile_context>

<pallas_src>
import jax
import jax.numpy as jnp
from jax.experimental import pallas as pl
from jax.experimental.pallas import tpu as pltpu


def _deriv_quad_relu_kernel(x_ref, o_ref):
    # x_ref tile: (tm, tn) in the input dtype; o_ref tile: (tn, tm) f32.
    # Transpose in the narrow dtype (halves XLU bytes for bf16 inputs), then
    # cast to f32 before compare/double (matches torch's .float() promotion).
    xt = x_ref[...].T.astype(jnp.float32)
    o_ref[...] = jnp.where(xt > 0.0, 2.0 * xt, 0.0)


def _pick_tile(dim, candidates):
    """Pick a tile size for `dim` from 128-aligned `candidates` (descending).

    Prefers the largest candidate that divides `dim` (no padding).  Tiny dims
    (< smallest candidate) use a full-extent block.  Ragged larger dims take
    the largest candidate <= dim and get zero-padded in the wrapper, keeping
    a multi-block grid (pipelining + both TCs on v7x) instead of one giant
    full-extent block.
    """
    for t in candidates:
        if t <= dim and dim % t == 0:
            return t
    if dim < candidates[-1]:
        return dim  # tiny dim: full-extent block satisfies the (8,128) rule
    for t in candidates:
        if t <= dim:
            return t
    return candidates[-1]


def deriv_quad_relu(x, tm=None, tn=None):
    """Pallas implementation of DerivQuadRelU.forward for 2-D x.

    Returns (N, M) float32 where out = (x.T > 0).float() * 2 * x.T.
    Input is streamed in its native dtype (e.g. bf16) to halve read bytes.
    """
    M, N = x.shape
    # tm is the output lane dim (f32 write stream = 2/3 of HBM traffic):
    # grow it preferentially for long, unmasked vst row segments.
    tm = tm or _pick_tile(M, (1024, 512, 256, 128))
    tn = tn or _pick_tile(N, (512, 256, 128))

    # Pad ragged shapes up to tile multiples (zeros -> padded region maps to 0
    # in the output and is sliced off); aligned shapes pay nothing.
    Mp = tm * pl.cdiv(M, tm)
    Np = tn * pl.cdiv(N, tn)
    xp = x if (Mp == M and Np == N) else jnp.pad(x, ((0, Mp - M), (0, Np - N)))

    grid = (Mp // tm, Np // tn)

    in_bytes = Mp * Np * xp.dtype.itemsize
    out_bytes = Mp * Np * 4  # f32 output per .float()
    cost = pl.CostEstimate(flops=2 * Mp * Np,
                           transcendentals=0,
                           bytes_accessed=in_bytes + out_bytes)

    out = pl.pallas_call(
        _deriv_quad_relu_kernel,
        out_shape=jax.ShapeDtypeStruct((Np, Mp), jnp.float32),
        grid=grid,
        in_specs=[pl.BlockSpec((tm, tn), lambda i, j: (i, j))],
        # Output block index is the swapped grid index -> global transpose;
        # lane dim of the output tile is tm (large multiple of 128 when M allows).
        out_specs=pl.BlockSpec((tn, tm), lambda i, j: (j, i)),
        compiler_params=pltpu.CompilerParams(
            dimension_semantics=("parallel", "parallel"),
            # Bump past v5e's 16 MiB default so 1024x512 tiles (+ Mosaic
            # transpose/cast temporaries) fit; 32 MiB stays safely inside
            # v7x's 64 MiB physical VMEM.
            vmem_limit_bytes=32 * 1024 * 1024),
        cost_estimate=cost,
    )(xp)

    if Mp != M or Np != N:
        out = out[:N, :M]
    return out


def _reference(x):
    xt = x.T.astype(jnp.float32)
    return jnp.where(xt > 0.0, 2.0 * xt, 0.0)


if __name__ == "__main__":
    key = jax.random.PRNGKey(0)
    k1, k2, k3 = jax.random.split(key, 3)

    # 1) Small 2-D input consistent with the module (torch .t() => 2-D).
    x_small = jax.random.normal(k1, (8, 32), dtype=jnp.float32)
    out_small = jax.block_until_ready(deriv_quad_relu(x_small))
    assert out_small.shape == (32, 8)
    assert out_small.dtype == jnp.float32
    assert jnp.allclose(out_small, _reference(x_small), atol=1e-6), \
        "small-shape mismatch"

    # 2) Aligned tiled path: bf16 streaming input, multi-block grid,
    #    lane-dense 1024-wide f32 output tiles.
    x_big = jax.random.normal(k2, (2048, 256), dtype=jnp.bfloat16)
    out_big = jax.block_until_ready(deriv_quad_relu(x_big))
    assert out_big.shape == (256, 2048)
    assert out_big.dtype == jnp.float32
    assert jnp.allclose(out_big, _reference(x_big), atol=1e-6), \
        "tiled-path mismatch"

    # 3) Ragged (non-128-aligned) shape: exercises cdiv grid + pad + slice.
    x_rag = jax.random.normal(k3, (300, 130), dtype=jnp.float32)
    out_rag = jax.block_until_ready(deriv_quad_relu(x_rag))
    assert out_rag.shape == (130, 300)
    assert out_rag.dtype == jnp.float32
    assert jnp.allclose(out_rag, _reference(x_rag), atol=1e-6), \
        "ragged-path mismatch"

    print("KERNEL_OK")
</pallas_src>

<mosaic_0001>
module attributes {stable_mosaic.version = 11 : i64} {
  func.func @_deriv_quad_relu_kernel(%arg0: i32, %arg1: i32, %arg2: memref<8x32xf32, #tpu.memory_space<vmem>>, %arg3: memref<32x8xf32, #tpu.memory_space<vmem>>) attributes {dimension_semantics = [#tpu.dimension_semantics<parallel>, #tpu.dimension_semantics<parallel>], iteration_bounds = array<i64: 1, 1>, scalar_prefetch = 0 : i64, scratch_operands = 0 : i64, tpu.core_type = #tpu.core_type<tc>, window_params = [{transform_indices = @transform_0, window_bounds = array<i64: 8, 32>}, {transform_indices = @transform_1, window_bounds = array<i64: 32, 8>}]} {
    %c0 = arith.constant 0 : index
    %c0_0 = arith.constant 0 : index
    %0 = vector.load %arg2[%c0, %c0_0] : memref<8x32xf32, #tpu.memory_space<vmem>>, vector<8x32xf32>
    %1 = tpu.transpose %0, [1, 0] : vector<8x32xf32> -> vector<32x8xf32>
    %cst = arith.constant 0.000000e+00 : f32
    %2 = vector.broadcast %cst : f32 to vector<32x8xf32>
    %3 = arith.cmpf ogt, %1, %2 : vector<32x8xf32>
    %cst_1 = arith.constant 2.000000e+00 : f32
    %4 = vector.broadcast %cst_1 : f32 to vector<32x8xf32>
    %5 = arith.mulf %4, %1 : vector<32x8xf32>
    %cst_2 = arith.constant 0.000000e+00 : f32
    %6 = vector.broadcast %cst_2 : f32 to vector<32x8xf32>
    %7 = arith.select %3, %5, %6 : vector<32x8xi1>, vector<32x8xf32>
    %c0_3 = arith.constant 0 : index
    %c0_4 = arith.constant 0 : index
    %8 = vector.load %arg3[%c0_3, %c0_4] : memref<32x8xf32, #tpu.memory_space<vmem>>, vector<32x8xf32>
    tpu.vector_store %arg3[%c0_3, %c0_4], %7 {strides = array<i32>} : memref<32x8xf32, #tpu.memory_space<vmem>>, vector<32x8xf32>,
    return
  }
  func.func @transform_0(%arg0: i32, %arg1: i32) -> (i32, i32) {
    %c0_i32 = arith.constant 0 : i32
    return %arg0, %arg1 : i32, i32
  }
  func.func @transform_1(%arg0: i32, %arg1: i32) -> (i32, i32) {
    %c0_i32 = arith.constant 0 : i32
    return %arg1, %arg0 : i32, i32
  }
}

</mosaic_0001>

<llo_original>
// kernel: tpu_custom_call.1
$region0: #{tpu_custom_call.1}
  #allocation0 [shape = 'u32[]', space=smem, size = 0x4, offset = 0x4, fixed_abs, tag = 'smem constant byte address 0x4 - core index']
  #allocation1 [shape = 'u32[72,128]{1,0:T(1,128)}', space=vmem, size = 0x9000, scoped, tag = 'internal scratch']
  %s0 = inlined_call_operand.hbm [shape: f32[8,32], index: 0, kind: input, shape index: {}]
  %s1 = inlined_call_operand.vmem [shape: f32[32,8], index: 1, kind: output, shape index: {}]
  %s2 = sld [smem:[#allocation0]]
  $region18: #{tpu_custom_call.1} parent=0
    _
  %s4 = ssub.s32 1, %s2
  %s5 = scalar_select 0, %s4, %s2
  $region1: #{tpu_custom_call.1} parent=0
    #allocation2 [shape = 'u8[4096]{0}', space=vmem, size = 0x1000, scoped, tag = 'input window, operand 0, single buffered']
    #allocation3 [shape = 's32[1]{0}', space=sflag, size = 0x4, scoped, tag = 'scoped memory for tpu_custom_call.1']
    %6 = vsyncpa [#allocation3], 0
    // Predicated region
    $region2: #{tpu_custom_call.1} parent=1 // pred_check
      _
    $region3: #{tpu_custom_call.1} parent=1 // pred_check_branch
      %8 = sbr.rel (0) target = $region5
    $region4: #{tpu_custom_call.1} parent=1 // pred_region
      %10 = vsyncadd [#allocation3], 0
      %s12 = sshll.u32 %s0, 4
      %s13 = int_to_ptr.hbm [resolvable:$true] %s12
      %s14 = sshll.u32 [#allocation2], 4
      %s15 = int_to_ptr.vmem [resolvable:$true] %s14
      %17 = dma.hbm_to_vmem [thread:$0]  %s13, 128, %s15, [#allocation3]
    $region5: #{tpu_custom_call.1} parent=1 // pred_fallthru
      _
    // Predicated region
    $region6: #{tpu_custom_call.1} parent=1 // pred_check
      _
    $region7: #{tpu_custom_call.1} parent=1 // pred_check_branch
      %19 = sbr.rel (0) target = $region9
    $region8: #{tpu_custom_call.1} parent=1 // pred_region
      %21 = dma.done [#allocation3], 128
    $region9: #{tpu_custom_call.1} parent=1 // pred_fallthru
      _
    %v22 = vld [vmem:[#allocation2] sm:$0xff]
    %23 = vxpose.xlu0.b32.start [1/16] %v22, 128
    %24 = vxpose.xlu0.b32.cont [2/16] 0.0, 128
    %25 = vxpose.xlu0.b32.cont [3/16] 0.0, 128
    %26 = vxpose.xlu0.b32.cont [4/16] 0.0, 128
    %27 = vxpose.xlu0.b32.cont [5/16] 0.0, 128
    %28 = vxpose.xlu0.b32.cont [6/16] 0.0, 128
    %29 = vxpose.xlu0.b32.cont [7/16] 0.0, 128
    %30 = vxpose.xlu0.b32.cont [8/16] 0.0, 128
    %31 = vxpose.xlu0.b32.cont [9/16] 0.0, 128
    %32 = vxpose.xlu0.b32.cont [10/16] 0.0, 128
    %33 = vxpose.xlu0.b32.cont [11/16] 0.0, 128
    %34 = vxpose.xlu0.b32.cont [12/16] 0.0, 128
    %35 = vxpose.xlu0.b32.cont [13/16] 0.0, 128
    %36 = vxpose.xlu0.b32.cont [14/16] 0.0, 128
    %37 = vxpose.xlu0.b32.cont [15/16] 0.0, 128
    %38 = vxpose.xlu0.b32.end [16/16] 0.0, 128
    %v39 = vpop.trf.xlu0
    %v40 = vpop.trf.xlu0
    %v41 = vpop.trf.xlu0
    %v42 = vpop.trf.xlu0
    %v43 = vpop.trf.xlu0
    %v44 = vpop.trf.xlu0
    %v45 = vpop.trf.xlu0
    %v46 = vpop.trf.xlu0
    %v47 = vpop.trf.xlu0
    %v48 = vpop.trf.xlu0
    %v49 = vpop.trf.xlu0
    %v50 = vpop.trf.xlu0
    %v51 = vpop.trf.xlu0
    %v52 = vpop.trf.xlu0
    %v53 = vpop.trf.xlu0
    %v54 = vpop.trf.xlu0
    %vm55 = vcmp.gt.f32.partialorder %v39, 0.0
    %vm56 = vcmp.gt.f32.partialorder %v40, 0.0
    %vm57 = vcmp.gt.f32.partialorder %v41, 0.0
    %vm58 = vcmp.gt.f32.partialorder %v42, 0.0
    %v59 = vmul.f32 %v39, 2.0
    %v60 = vmul.f32 %v40, 2.0
    %v61 = vmul.f32 %v41, 2.0
    %v62 = vmul.f32 %v42, 2.0
    %v63 = vsel %vm55, %v59, 0.0
    %v64 = vsel %vm56, %v60, 0.0
    %v65 = vsel %vm57, %v61, 0.0
    %v66 = vsel %vm58, %v62, 0.0
    %vm67 = vcmask 64512
    %68 = vst.msk [vmem:[%s1] sm:$0xff] %vm67, %v63
    %69 = vst.msk [vmem:[%s1 + $0x8] sm:$0xff] %vm67, %v64
    %70 = vst.msk [vmem:[%s1 + $0x10] sm:$0xff] %vm67, %v65
    %71 = vst.msk [vmem:[%s1 + $0x18] sm:$0xff] %vm67, %v66
    // Predicated region
    $region10: #{tpu_custom_call.1} parent=1 // pred_check
      _
    $region11: #{tpu_custom_call.1} parent=1 // pred_check_branch
      %73 = sbr.rel (0) target = $region13
    $region12: #{tpu_custom_call.1} parent=1 // pred_region
      _
    $region13: #{tpu_custom_call.1} parent=1 // pred_fallthru
      _
    // Predicated region
    $region14: #{tpu_custom_call.1} parent=1 // pred_check
      _
    $region15: #{tpu_custom_call.1} parent=1 // pred_check_branch
      %75 = sbr.rel (0) target = $region17
    $region16: #{tpu_custom_call.1} parent=1 // pred_region
      _
    $region17: #{tpu_custom_call.1} parent=1 // pred_fallthru
      _
    %76 = vsyncpa [#allocation3], 1

</llo_original>
